<compile_context>
chip_gen: v7x
topology: tpu7x:2x2x1
jax: 0.10.0
libtpu: 0.0.40
codegen_flags: <defaults>
</compile_context>

<pallas_src>
import functools
import math

import jax
import jax.numpy as jnp
from jax.experimental import pallas as pl
from jax.experimental.pallas import tpu as pltpu


def _round_up(v, m):
    return ((v + m - 1) // m) * m


def _sublane(itemsize):
    return {4: 8, 2: 16, 1: 32}.get(int(itemsize), 8)


def _vmem_budgets():
    """(working-set budget, vmem_limit_bytes) — generation aware."""
    cap = None
    try:
        info = pltpu.get_tpu_info()
        cap = getattr(info, "vmem_capacity_bytes", None)
    except Exception:
        cap = None
    if cap is None:
        cap = 64 * 1024 * 1024
    if cap >= 100 * 1024 * 1024:          # v5e / v6e: 128 MiB physical VMEM
        return 64 * 1024 * 1024, 96 * 1024 * 1024
    return 26 * 1024 * 1024, 40 * 1024 * 1024   # v7x-class: 64 MiB physical


# ---------------------------------------------------------------------------
# Kernel 1: one-shot weight normalization (tiny; runs once per forward).
# Row-blocked over OC so huge weights never exceed scoped VMEM.
# ---------------------------------------------------------------------------
def _normalize_weight_kernel(gain_ref, w_ref, o_ref, *, eps, inv_sqrt_k):
    """gain_ref: SMEM (1,) f32; w_ref: (blk, K) raw weight rows; o_ref: (blk, K)."""
    w = w_ref[...].astype(jnp.float32)
    # Normalize(): Norm = eps + sqrt(Norm.numel()/w.numel()) * ||w_row||
    #            = eps + ||w_row|| / sqrt(K)
    norm = jnp.sqrt(jnp.sum(w * w, axis=1, keepdims=True))
    w = w / (eps + norm * inv_sqrt_k)
    # forward(): w *= Gain / sqrt(w[0].numel())
    o_ref[...] = (w * (gain_ref[0] * inv_sqrt_k)).astype(o_ref.dtype)


def _normalize_weight(weight, *, gain, eps, out_dtype):
    oc = weight.shape[0]
    k = int(math.prod(weight.shape[1:]))
    w2d = weight.reshape(oc, k)
    gain_arr = jnp.asarray(gain, dtype=jnp.float32).reshape(1)
    blk = oc if oc <= 256 else 256
    kernel = functools.partial(_normalize_weight_kernel,
                               eps=float(eps), inv_sqrt_k=1.0 / math.sqrt(k))
    return pl.pallas_call(
        kernel,
        out_shape=jax.ShapeDtypeStruct((oc, k), out_dtype),
        grid=(pl.cdiv(oc, blk),),
        in_specs=[pl.BlockSpec(memory_space=pltpu.MemorySpace.SMEM),
                  pl.BlockSpec((blk, k), lambda i: (i, 0))],
        out_specs=pl.BlockSpec((blk, k), lambda i: (i, 0)),
        compiler_params=pltpu.CompilerParams(dimension_semantics=("arbitrary",)),
    )(gain_arr, w2d)


# ---------------------------------------------------------------------------
# Kernel 2: fused implicit-GEMM convolution.
#   x_ref : (1, 1, 1, Cg, SL)   flat, zero-padded input row-strip
#   w_ref : (1, 1, kh*kw, OCt, Cg) normalized weight taps for this OC tile
#   o_ref : (1, 1, 1, 1, OCt, th*Wp) output strip (padded-width columns)
# For every tap (i, j) the needed input window is the *static* lane slice
# xs[:, i*Wp + j : i*Wp + j + th*Wp] of the flat strip; columns wo >= Wo are
# wrap-around junk and are sliced off in the wrapper.
# ---------------------------------------------------------------------------
def _conv_kernel(x_ref, w_ref, o_ref, *, kh, kw, wp, lq):
    xs = x_ref[0, 0, 0]                       # (Cg, SL) resident in VMEM
    acc = None
    for i in range(kh):
        for j in range(kw):
            tap = i * kw + j
            off = i * wp + j                  # static lane offset
            part = jnp.dot(w_ref[0, 0, tap], xs[:, off:off + lq],
                           preferred_element_type=jnp.float32)
            acc = part if acc is None else acc + part
    o_ref[0, 0, 0, 0] = acc.astype(o_ref.dtype)


def _choose_oct(ocg, cg, khkw, in_bytes, sub, budget):
    """Pick the OC tile: tile OC instead of shrinking the spatial tile."""
    ocgp = _round_up(ocg, sub)
    if ocgp <= 256:
        oct_ = ocgp
    elif ocgp % 256 == 0:
        oct_ = 256
    elif ocgp % 128 == 0:
        oct_ = 128
    else:
        oct_ = 256
        ocgp = _round_up(ocg, 256)
    # Keep the (double-buffered) weight slab a small fraction of the budget.
    while oct_ > sub and 2 * khkw * oct_ * cg * in_bytes > budget // 3:
        oct_ = max(sub, _round_up(oct_ // 2, sub))
        ocgp = _round_up(ocg, oct_)
    return oct_, ocgp


def _conv_forward(x, w_n, *, groups, kh, kw, pad, out_dtype, budget, vmem_limit):
    n, cin, h, w = x.shape
    cg = cin // groups
    oc = w_n.shape[0]
    ocg = oc // groups
    khkw = kh * kw

    hp, wp = h + 2 * pad, w + 2 * pad
    ho, wo = hp - kh + 1, wp - kw + 1
    assert ho >= 1 and wo >= 1

    in_b = jnp.dtype(x.dtype).itemsize
    out_b = jnp.dtype(out_dtype).itemsize
    sub = _sublane(in_b)

    # --- tile selection (generation-aware budget, f32 acc + 15% headroom) ---
    oct_, ocgp = _choose_oct(ocg, cg, khkw, in_b, sub, budget)
    t_tiles = ocgp // oct_

    def need(th_):
        sl_ = (th_ + kh) * wp                 # strip rows = th + kh - 1 (+1 spare)
        lq_ = th_ * wp
        return int((2 * cg * sl_ * in_b            # double-buffered x strip
                    + 2 * khkw * oct_ * cg * in_b  # weight (counted 2x)
                    + 2 * oct_ * lq_ * out_b       # double-buffered out strip
                    + oct_ * lq_ * 4) * 1.15)      # f32 accumulator + headroom

    th = ho
    while th > 1 and need(th) > budget:
        th = max(1, (th + 1) // 2)
    r_blocks = pl.cdiv(ho, th)
    sh = th + kh - 1
    sl = (sh + 1) * wp                        # one spare row covers the kw-1 tail
    lq = th * wp

    # --- weight: pad OCg to the tile grid and lay out as (G, T, kh*kw, OCt, Cg) ---
    w5 = w_n.reshape(groups, ocg, cg, kh, kw)
    if ocgp != ocg:
        w5 = jnp.pad(w5, ((0, 0), (0, ocgp - ocg), (0, 0), (0, 0), (0, 0)))
    w_arr = w5.transpose(0, 1, 3, 4, 2).reshape(groups, t_tiles, oct_, khkw, cg)
    w_arr = w_arr.transpose(0, 1, 3, 2, 4)    # (G, T, khkw, OCt, Cg)

    # --- input: single spatial pad + group split + flat row strips (no im2col) ---
    rows = (r_blocks - 1) * th + sh + 1
    bottom = rows - hp                        # >= 1 by construction
    xp = jnp.pad(x, ((0, 0), (0, 0), (pad, pad + bottom), (pad, pad)))
    xp = xp.reshape(n, groups, cg, rows, wp)
    if r_blocks == 1:
        x_strips = xp.reshape(n, groups, 1, cg, rows * wp)
    else:
        x_strips = jnp.stack(
            [xp[:, :, :, r * th:r * th + sh + 1, :] for r in range(r_blocks)],
            axis=2).reshape(n, groups, r_blocks, cg, sl)

    kernel = functools.partial(_conv_kernel, kh=kh, kw=kw, wp=wp, lq=lq)
    out_elems = n * groups * t_tiles * r_blocks * oct_ * lq
    cost = pl.CostEstimate(
        flops=int(2 * out_elems * cg * khkw),
        transcendentals=0,
        bytes_accessed=int(x_strips.size * in_b + w_arr.size * in_b
                           + out_elems * out_b))

    out = pl.pallas_call(
        kernel,
        out_shape=jax.ShapeDtypeStruct(
            (n, groups, t_tiles, r_blocks, oct_, lq), out_dtype),
        grid=(n, groups, t_tiles, r_blocks),
        in_specs=[
            # input strip: changes every row-strip step (streams from HBM)
            pl.BlockSpec((1, 1, 1, cg, sl),
                         lambda ni, gi, ti, ri: (ni, gi, ri, 0, 0)),
            # weight: revisited across (ni, ri) -> re-DMA'd only on (g, t) change
            pl.BlockSpec((1, 1, khkw, oct_, cg),
                         lambda ni, gi, ti, ri: (gi, ti, 0, 0, 0)),
        ],
        out_specs=pl.BlockSpec((1, 1, 1, 1, oct_, lq),
                               lambda ni, gi, ti, ri: (ni, gi, ti, ri, 0, 0)),
        compiler_params=pltpu.CompilerParams(
            dimension_semantics=("parallel", "parallel", "parallel", "parallel"),
            vmem_limit_bytes=vmem_limit),
        cost_estimate=cost,
    )(x_strips, w_arr)

    # --- reassemble NCHW: free reshapes + one slice (transpose only if R > 1) ---
    out = out.reshape(n, groups, t_tiles, r_blocks, oct_, th, wp)
    out = out.transpose(0, 1, 2, 4, 3, 5, 6)          # free when r_blocks == 1
    out = out.reshape(n, groups, ocgp, r_blocks * th, wp)
    out = out[:, :, :ocg, :ho, :wo]
    return out.reshape(n, oc, ho, wo)


# ---------------------------------------------------------------------------
# Kernel 3: linear path (weight.ndim == 2): x @ Normalize(w).T * Gain/sqrt(K).
# ---------------------------------------------------------------------------
def _linear_kernel(x_ref, w_ref, o_ref):
    o_ref[...] = jnp.dot(x_ref[...], w_ref[...],
                         preferred_element_type=jnp.float32).astype(o_ref.dtype)


def _linear_forward(x, w_n, *, out_dtype, budget, vmem_limit):
    lead = x.shape[:-1]
    k = x.shape[-1]
    m = int(math.prod(lead)) if lead else 1
    oc = w_n.shape[0]
    xm = x.reshape(m, k)

    in_b = jnp.dtype(x.dtype).itemsize
    out_b = jnp.dtype(out_dtype).itemsize
    sub = _sublane(in_b)

    # Lane-dense OC tiling (multiples of 128); pad weight columns with zeros.
    if oc <= 512:
        tn = _round_up(oc, 128)
        ocp = tn
    else:
        tn = 512
        ocp = _round_up(oc, tn)
    wt = w_n.T
    if ocp != oc:
        wt = jnp.pad(wt, ((0, 0), (0, ocp - oc)))

    # M tiling: dtype-aware sublane rounding, no HBM pad of M (ragged last tile).
    tm = min(512, _round_up(m, sub))

    def need(t):
        return int((2 * t * k * in_b + 2 * k * tn * in_b
                    + 2 * t * tn * out_b + t * tn * 4) * 1.15)

    while tm > sub and need(tm) > budget:
        if tm > 128:
            tm = max(sub, _round_up(tm - 128, sub))
        else:
            tm = max(sub, _round_up(tm // 2, sub))
    # TODO(synk): add a K reduction grid axis if K*tn alone exceeds the budget.

    cost = pl.CostEstimate(flops=int(2 * m * k * ocp), transcendentals=0,
                           bytes_accessed=int(xm.size * in_b + wt.size * in_b
                                              + m * ocp * out_b))
    out = pl.pallas_call(
        _linear_kernel,
        out_shape=jax.ShapeDtypeStruct((m, ocp), out_dtype),
        grid=(pl.cdiv(m, tm), ocp // tn),
        in_specs=[pl.BlockSpec((tm, k), lambda i, j: (i, 0)),
                  pl.BlockSpec((k, tn), lambda i, j: (0, j))],
        out_specs=pl.BlockSpec((tm, tn), lambda i, j: (i, j)),
        compiler_params=pltpu.CompilerParams(
            dimension_semantics=("parallel", "parallel"),
            vmem_limit_bytes=vmem_limit),
        cost_estimate=cost,
    )(xm, wt)
    if ocp != oc:
        out = out[:, :oc]
    return out.reshape(*lead, oc)


# ---------------------------------------------------------------------------
# Forward pass of WeightNormalizedConvolution.
# ---------------------------------------------------------------------------
def weight_normalized_convolution(x, weight, *, groups=1, enable_padding=True,
                                  gain=1.0, eps=1e-4):
    """x: (N, Cin, H, W) NCHW (or (..., Cin) if weight.ndim == 2).
    weight: (OC, Cin//G, KH, KW) or (OC, Cin)."""
    budget, vmem_limit = _vmem_budgets()

    if weight.ndim == 2:
        assert x.shape[-1] == weight.shape[1]
        w_n = _normalize_weight(weight, gain=gain, eps=eps, out_dtype=x.dtype)
        return _linear_forward(x, w_n, out_dtype=x.dtype,
                               budget=budget, vmem_limit=vmem_limit)

    n, cin, h, w = x.shape
    oc, cg, kh, kw = weight.shape
    assert cin == cg * groups and oc % groups == 0
    # PyTorch module: F.conv2d(..., padding=(kw//2,)) -> expanded to BOTH dims.
    pad = (kw // 2) if enable_padding else 0

    w_n = _normalize_weight(weight, gain=gain, eps=eps, out_dtype=x.dtype)  # (OC, K)
    return _conv_forward(x, w_n, groups=groups, kh=kh, kw=kw, pad=pad,
                         out_dtype=x.dtype, budget=budget, vmem_limit=vmem_limit)


# ---------------------------------------------------------------------------
# Pure-JAX reference mirroring the PyTorch forward (for the self-test).
# ---------------------------------------------------------------------------
def _reference(x, weight, *, groups, enable_padding, gain, eps):
    w = weight.astype(jnp.float32)
    axes = tuple(range(1, w.ndim))
    norm = jnp.sqrt(jnp.sum(w * w, axis=axes, keepdims=True))
    fan_in = int(math.prod(w.shape[1:]))
    norm = eps + norm / math.sqrt(fan_in)
    w = w / norm
    w = w * (gain / math.sqrt(fan_in))
    w = w.astype(x.dtype)
    if w.ndim == 2:
        return x @ w.T
    pad = (w.shape[-1] // 2) if enable_padding else 0
    return jax.lax.conv_general_dilated(
        x, w, window_strides=(1, 1), padding=[(pad, pad), (pad, pad)],
        dimension_numbers=("NCHW", "OIHW", "NCHW"),
        feature_group_count=groups)


if __name__ == "__main__":
    key = jax.random.PRNGKey(0)
    kx, kw_, kw2, kxl, kwl = jax.random.split(key, 5)

    # Module config: InputChannels=4, OutputChannels=8, Groups=1,
    #                EnablePadding=True, KernelSize=(3, 3)
    N, Cin, H, W = 2, 4, 16, 16
    OC, G, KH, KW = 8, 1, 3, 3

    x = jax.random.normal(kx, (N, Cin, H, W), dtype=jnp.float32)
    weight = jax.random.normal(kw_, (OC, Cin // G, KH, KW), dtype=jnp.float32)

    out = weight_normalized_convolution(
        x, weight, groups=G, enable_padding=True, gain=1.0)
    out = jax.block_until_ready(out)
    ref = _reference(x, weight, groups=G, enable_padding=True, gain=1.0, eps=1e-4)
    assert out.shape == ref.shape == (N, OC, H, W), (out.shape, ref.shape)
    assert jnp.allclose(out, ref, atol=1e-3, rtol=1e-3), \
        float(jnp.max(jnp.abs(out - ref)))

    # Grouped conv path (Groups=2).
    weight_g = jax.random.normal(kw2, (OC, Cin // 2, KH, KW), dtype=jnp.float32)
    out_g = jax.block_until_ready(weight_normalized_convolution(
        x, weight_g, groups=2, enable_padding=True, gain=1.5))
    ref_g = _reference(x, weight_g, groups=2, enable_padding=True,
                       gain=1.5, eps=1e-4)
    assert out_g.shape == ref_g.shape == (N, OC, H, W)
    assert jnp.allclose(out_g, ref_g, atol=1e-3, rtol=1e-3), \
        float(jnp.max(jnp.abs(out_g - ref_g)))

    # Linear path (weight.ndim == 2).
    xl = jax.random.normal(kxl, (8, 32), dtype=jnp.float32)
    wl = jax.random.normal(kwl, (16, 32), dtype=jnp.float32)
    out_l = jax.block_until_ready(weight_normalized_convolution(xl, wl, gain=1.0))
    ref_l = _reference(xl, wl, groups=1, enable_padding=True, gain=1.0, eps=1e-4)
    assert out_l.shape == ref_l.shape == (8, 16)
    assert jnp.allclose(out_l, ref_l, atol=1e-3, rtol=1e-3), \
        float(jnp.max(jnp.abs(out_l - ref_l)))

    print("KERNEL_OK")
</pallas_src>

<mosaic_0001>
module attributes {stable_mosaic.version = 11 : i64} {
  func.func @_normalize_weight_kernel(%arg0: i32, %arg1: memref<1xf32, #tpu.memory_space<smem>>, %arg2: memref<8x36xf32, #tpu.memory_space<vmem>>, %arg3: memref<8x36xf32, #tpu.memory_space<vmem>>) attributes {dimension_semantics = [#tpu.dimension_semantics<arbitrary>], iteration_bounds = array<i64: 1>, scalar_prefetch = 0 : i64, scratch_operands = 0 : i64, tpu.core_type = #tpu.core_type<tc>, window_params = [{transform_indices = @transform_0, window_bounds = array<i64: 1>}, {transform_indices = @transform_1, window_bounds = array<i64: 8, 36>}, {transform_indices = @transform_2, window_bounds = array<i64: 8, 36>}]} {
    %c0 = arith.constant 0 : index
    %c0_0 = arith.constant 0 : index
    %0 = vector.load %arg2[%c0, %c0_0] : memref<8x36xf32, #tpu.memory_space<vmem>>, vector<8x36xf32>
    %1 = arith.mulf %0, %0 : vector<8x36xf32>
    %cst = arith.constant dense<0.000000e+00> : vector<8xf32>
    %2 = vector.multi_reduction <add>, %1, %cst [1] : vector<8x36xf32> to vector<8xf32>
    %3 = vector.shape_cast %2 : vector<8xf32> to vector<8x1xf32>
    %4 = math.sqrt %3 : vector<8x1xf32>
    %cst_1 = arith.constant 0.166666672 : f32
    %5 = vector.broadcast %cst_1 : f32 to vector<8x1xf32>
    %6 = arith.mulf %4, %5 : vector<8x1xf32>
    %cst_2 = arith.constant 9.99999974E-5 : f32
    %7 = vector.broadcast %cst_2 : f32 to vector<8x1xf32>
    %8 = arith.addf %7, %6 : vector<8x1xf32>
    %9 = vector.broadcast %8 : vector<8x1xf32> to vector<8x36xf32>
    %10 = arith.divf %0, %9 : vector<8x36xf32>
    %c0_3 = arith.constant 0 : index
    %11 = memref.load %arg1[%c0_3] : memref<1xf32, #tpu.memory_space<smem>>
    %cst_4 = arith.constant 0.166666672 : f32
    %12 = arith.mulf %11, %cst_4 : f32
    %13 = vector.broadcast %12 : f32 to vector<8x36xf32>
    %14 = arith.mulf %10, %13 : vector<8x36xf32>
    %c0_5 = arith.constant 0 : index
    %c0_6 = arith.constant 0 : index
    %15 = vector.load %arg3[%c0_5, %c0_6] : memref<8x36xf32, #tpu.memory_space<vmem>>, vector<8x36xf32>
    tpu.vector_store %arg3[%c0_5, %c0_6], %14 {strides = array<i32>} : memref<8x36xf32, #tpu.memory_space<vmem>>, vector<8x36xf32>,
    return
  }
  func.func @transform_0(%arg0: i32) -> i32 {
    %c0_i32 = arith.constant 0 : i32
    %c0_i32_0 = arith.constant 0 : i32
    return %c0_i32 : i32
  }
  func.func @transform_1(%arg0: i32) -> (i32, i32) {
    %c0_i32 = arith.constant 0 : i32
    %c0_i32_0 = arith.constant 0 : i32
    return %arg0, %c0_i32 : i32, i32
  }
  func.func @transform_2(%arg0: i32) -> (i32, i32) {
    %c0_i32 = arith.constant 0 : i32
    %c0_i32_0 = arith.constant 0 : i32
    return %arg0, %c0_i32 : i32, i32
  }
}

</mosaic_0001>

<llo_original>
// kernel: tpu_custom_call.1
$region0: #{tpu_custom_call.1}
  #allocation0 [shape = 'u32[]', space=smem, size = 0x4, offset = 0x4, fixed_abs, tag = 'smem constant byte address 0x4 - core index']
  #allocation1 [shape = 'u32[144,128]{1,0:T(1,128)}', space=vmem, size = 0x12000, scoped, tag = 'internal scratch']
  #allocation2 [shape = 'f32[1]{0:T(128)S(6)}', space=smem, size = 0x200, scoped, tag = 'scoped memory for tpu_custom_call.1']
  %s0 = inlined_call_operand.<no memory space> [shape: f32[1], index: 0, kind: input, shape index: {}]
  %s1 = inlined_call_operand.hbm [shape: f32[8,36], index: 1, kind: input, shape index: {}]
  %s2 = inlined_call_operand.hbm [shape: f32[8,36], index: 2, kind: output, shape index: {}]
  %s3 = sld [smem:[#allocation0]]
  $region22: #{tpu_custom_call.1} parent=0
    _
  %s5 = ssub.s32 1, %s3
  %s6 = scalar_select 0, %s5, %s3
  %7 = sst [smem:[#allocation2]] %s0
  $region1: #{tpu_custom_call.1} parent=0
    #allocation3 [shape = 'u8[4096]{0}', space=vmem, size = 0x1000, scoped, tag = 'input window, operand 1, single buffered']
    #allocation4 [shape = 's32[1]{0}', space=sflag, size = 0x4, scoped, tag = 'scoped memory for tpu_custom_call.1']
    #allocation5 [shape = 's32[1]{0}', space=sflag, size = 0x4, scoped, tag = 'scoped memory for tpu_custom_call.1']
    #allocation6 [shape = 'u8[4096]{0}', space=vmem, size = 0x1000, scoped, tag = 'output window, operand 0, single buffered']
    %8 = vsyncpa [#allocation4], 0
    %9 = vsyncpa [#allocation5], 0
    // Predicated region
    $region2: #{tpu_custom_call.1} parent=1 // pred_check
      _
    $region3: #{tpu_custom_call.1} parent=1 // pred_check_branch
      %11 = sbr.rel (0) target = $region5
    $region4: #{tpu_custom_call.1} parent=1 // pred_region
      _
    $region5: #{tpu_custom_call.1} parent=1 // pred_fallthru
      _
    // Predicated region
    $region6: #{tpu_custom_call.1} parent=1 // pred_check
      _
    $region7: #{tpu_custom_call.1} parent=1 // pred_check_branch
      %13 = sbr.rel (0) target = $region9
    $region8: #{tpu_custom_call.1} parent=1 // pred_region
      %s15 = ssub.s32 128, 128
      %16 = vsyncadd [#allocation4], %s15
      %s18 = sshll.u32 [#allocation3], 4
      %s19 = int_to_ptr.vmem [resolvable:$true] %s18
      %21 = dma.hbm_to_vmem [thread:$0]  %s1, 128, %s19, [#allocation4]
    $region9: #{tpu_custom_call.1} parent=1 // pred_fallthru
      _
    // Predicated region
    $region10: #{tpu_custom_call.1} parent=1 // pred_check
      _
    $region11: #{tpu_custom_call.1} parent=1 // pred_check_branch
      %23 = sbr.rel (0) target = $region13
    $region12: #{tpu_custom_call.1} parent=1 // pred_region
      %24 = dma.done [#allocation4], 128
    $region13: #{tpu_custom_call.1} parent=1 // pred_fallthru
      _
    %v25 = vld [vmem:[#allocation3] sm:$0xff]
    %v26 = vmul.f32 %v25, %v25
    %vm27 = vcmask 293888
    %v28 = vsel %vm27, %v26, 0.0
    %29 = vadd.xlane.f32.xlu0 %v28
    %v30 = vpop.xlane.xlu0 %29
    %v31 = vrsqrt.pop %v30
    %v32 = vmul.f32 %v30, %v31
    %vm33 = vcmp.eq.f32.partialorder %v30, inf
    %v34 = vsel %vm33, %v30, %v32
    %vm35 = vcmp.eq.f32.partialorder %v30, 0.0
    %v36 = vand.u32 %v30, 2147483648
    %v37 = vsel %vm35, %v36, %v34
    %v38 = vmul.f32 %v37, 0.16666667
    %v39 = vadd.f32 %v38, 0.0001
    %v40 = vrcp.pop %v39
    %v41 = vmul.f32 %v25, %v40
    %s42 = sld [smem:[#allocation2]]
    %s43 = smul.f32 %s42, 0.16666667
    %v44 = vstv %s43
    %v45 = vmul.f32 %v41, %v44
    %46 = vst.msk [vmem:[#allocation6] sm:$0xff] %vm27, %v45
    // Predicated region
    $region14: #{tpu_custom_call.1} parent=1 // pred_check
      _
    $region15: #{tpu_custom_call.1} parent=1 // pred_check_branch
      %48 = sbr.rel (0) target = $region17
    $region16: #{tpu_custom_call.1} parent=1 // pred_region
      %s50 = ssub.s32 128, 128
      %51 = vsyncadd [#allocation5], %s50
      %s53 = sshll.u32 [#allocation6], 4
      %s54 = int_to_ptr.vmem [resolvable:$true] %s53
      %56 = dma.vmem_to_hbm [thread:$0]  %s54, 128, %s2, [#allocation5]
    $region17: #{tpu_custom_call.1} parent=1 // pred_fallthru
      _
    // Predicated region
    $region18: #{tpu_custom_call.1} parent=1 // pred_check
      _
    $region19: #{tpu_custom_call.1} parent=1 // pred_check_branch
      %58 = sbr.rel (0) target = $region21
    $region20: #{tpu_custom_call.1} parent=1 // pred_region
      %59 = dma.done [#allocation5], 128
    $region21: #{tpu_custom_call.1} parent=1 // pred_fallthru
      _
    %60 = vsyncpa [#allocation4], 1
    %61 = vsyncpa [#allocation5], 1

</llo_original>
